<compile_context>
chip_gen: v6e
topology: v6e:2x2x1
jax: 0.10.0
libtpu: 0.0.40
codegen_flags: <defaults>
</compile_context>

<pallas_src>
import functools

import jax
import jax.numpy as jnp
import numpy as np
from jax import lax
from jax.experimental import pallas as pl
from jax.experimental.pallas import tpu as pltpu


def _round_up(x, m):
    return ((x + m - 1) // m) * m


def _tpu_vmem_capacity():
    try:
        cap = getattr(pltpu.get_tpu_info(), "vmem_capacity_bytes", None)
        if cap:
            return int(cap)
    except Exception:
        pass
    return 64 << 20          # conservative default (v7x per-TC physical)


def _scoped_vmem_cap():
    # v5e/v6e (128 MiB physical) get a much larger scope than v7x (64 MiB per TC).
    cap = _tpu_vmem_capacity()
    return int(min(max(cap // 2, 24 << 20), 100 << 20))


def _vmem_limit_bytes(blocks, cap, headroom=4 << 20, floor=16 << 20):
    """blocks: list of (shape, itemsize). x2 for double buffering + headroom, clamped to cap."""
    total = sum(int(np.prod(s)) * int(isz) for s, isz in blocks)
    return int(min(max(2 * total + headroom, floor), cap))


def _choose_seq_tile(B, S, Hb, itemsize, budget_bytes):
    """Largest seq tile TS (multiple of 8) whose (B, TS, Hb) block fits the per-buffer budget.
    The wrapper zero-pads S up to a multiple of TS, so the budget holds for any S."""
    per_seq_row = max(B * Hb * itemsize, 1)
    ts = (budget_bytes // per_seq_row) // 8 * 8
    return int(min(max(ts, 8), _round_up(S, 8)))


def _recip(x):
    """EUP approx reciprocal + one Newton-Raphson step (~f32 accuracy, no VPU divide)."""
    r = pl.reciprocal(x, approx=True)
    return r * (2.0 - x * r)


# --------------------------------------------------------------------------
# Kernel 1: fused two-view BertForView head
#   pooled = tanh(dense(encoded.mean(dim=1)) + pooled)   (dropout = identity, eval)
#   logits = classifier(pooled)
# grid = (num_views, S_pad // TS); seq axis is a reduction into an f32 VMEM scratch accumulator.
# `encoded` is streamed in bf16 (memory-bound tensor); padded seq rows are zero so the sum is exact.
# --------------------------------------------------------------------------
def _bert_head_kernel(enc_ref, pooled_ref, dw_ref, db_ref, cw_ref, cb_ref,
                      logits_ref, pooled_out_ref, sum_ref, *, inv_seq):
    s = pl.program_id(1)

    @pl.when(s == 0)
    def _():
        sum_ref[...] = jnp.zeros_like(sum_ref)

    # bf16 HBM stream, f32 accumulation (upcast before the sublane reduce: also fine on v5e,
    # which has no bf16 VPU).  Hidden behind the pipelined DMA of the next seq tile.
    sum_ref[...] += jnp.sum(enc_ref[...].astype(jnp.float32), axis=1)

    @pl.when(s == pl.num_programs(1) - 1)
    def _():
        mean = sum_ref[...] * inv_seq                      # true-S mean (padded rows are zero)
        h = jnp.dot(mean, dw_ref[...], preferred_element_type=jnp.float32) + db_ref[...]
        p = jnp.tanh(h + pooled_ref[...])
        pooled_out_ref[...] = p
        logits_ref[...] = (jnp.dot(p, cw_ref[...], preferred_element_type=jnp.float32)
                           + cb_ref[...])


def bert_view_heads(encoded_views, pooled_views, dense_w, dense_b, cls_w, cls_b):
    """encoded_views: (V, B, S, Hb); pooled_views: (V, B, Hb).
    Returns (logits (V, B, D_pad)  [cols >= D are exactly zero], pooled_out (V, B, Hb))."""
    V, B, S, Hb = encoded_views.shape
    D = cls_w.shape[1]
    D_pad = _round_up(D, 128)                 # lane-dense classifier output (unmasked stores)
    if D_pad != D:
        cls_w = jnp.pad(cls_w, ((0, 0), (0, D_pad - D)))
        cls_b = jnp.pad(cls_b, ((0, 0), (0, D_pad - D)))

    # In a real pipeline the encoder would emit bf16 directly; the cast fuses upstream under jit.
    enc = encoded_views.astype(jnp.bfloat16)

    scoped = _scoped_vmem_cap()
    # Resident f32 bytes: weights/biases (double-buffer-conservative), pooled in/out, logits, scratch.
    resident = 4 * (2 * (Hb * Hb + Hb + Hb * D_pad + D_pad)
                    + 2 * (B * Hb) + (B * D_pad) + 2 * (B * Hb))
    enc_budget = max(2 << 20, (scoped - resident - (4 << 20)) // 2)   # /2: double-buffered stream
    TS = _choose_seq_tile(B, S, Hb, itemsize=2, budget_bytes=enc_budget)
    S_pad = _round_up(S, TS)
    if S_pad != S:
        enc = jnp.pad(enc, ((0, 0), (0, 0), (0, S_pad - S), (0, 0)))

    vmem_limit = int(min(scoped, max(16 << 20, resident + 2 * B * TS * Hb * 2 + (4 << 20))))

    logits_pad, pooled_out = pl.pallas_call(
        functools.partial(_bert_head_kernel, inv_seq=1.0 / S),
        grid=(V, S_pad // TS),
        in_specs=[
            pl.BlockSpec((None, B, TS, Hb), lambda v, s: (v, 0, s, 0)),
            pl.BlockSpec((None, B, Hb), lambda v, s: (v, 0, 0)),
            pl.BlockSpec((Hb, Hb), lambda v, s: (0, 0)),
            pl.BlockSpec((1, Hb), lambda v, s: (0, 0)),
            pl.BlockSpec((Hb, D_pad), lambda v, s: (0, 0)),
            pl.BlockSpec((1, D_pad), lambda v, s: (0, 0)),
        ],
        out_specs=(
            pl.BlockSpec((None, B, D_pad), lambda v, s: (v, 0, 0)),
            pl.BlockSpec((None, B, Hb), lambda v, s: (v, 0, 0)),
        ),
        out_shape=(jax.ShapeDtypeStruct((V, B, D_pad), jnp.float32),
                   jax.ShapeDtypeStruct((V, B, Hb), jnp.float32)),
        scratch_shapes=[pltpu.VMEM((B, Hb), jnp.float32)],
        compiler_params=pltpu.CompilerParams(
            dimension_semantics=("parallel", "arbitrary"),   # views -> separate TCs (v7x)
            vmem_limit_bytes=vmem_limit),
    )(enc, pooled_views, dense_w, dense_b, cls_w, cls_b)
    return logits_pad, pooled_out


# --------------------------------------------------------------------------
# Kernel 2: Student-t soft assignment (finetune mode) — all heads fused, gridded over row tiles
#   q = 1 / (1 + ||t_i - c_k||^2 / alpha);  q = q^((alpha+1)/2);  row-normalize
# cluster_layer is pre-transposed to (D_pad, K_pad) bf16 in the wrapper; c_sq precomputed in f32.
# --------------------------------------------------------------------------
def _q_kernel(t_ref, ct_ref, csq_ref, q_ref, *, alpha, k_valid):
    t = t_ref[...]                                                    # (TN, D_pad) f32
    cross = jnp.dot(t.astype(jnp.bfloat16), ct_ref[...],             # bf16 MXU, f32 accumulate
                    preferred_element_type=jnp.float32)               # (TN, K_pad) = t @ c.T
    t_sq = jnp.sum(t * t, axis=1, keepdims=True)                      # (TN, 1) f32
    dist = jnp.maximum(t_sq + csq_ref[...] - 2.0 * cross, 0.0)        # clamp cancellation
    q = _recip(1.0 + dist * (1.0 / alpha))
    power = (alpha + 1.0) / 2.0
    if power != 1.0:                                                  # static: alpha==1 skips pow
        q = q ** power
    col = lax.broadcasted_iota(jnp.int32, q.shape, dimension=1)
    q = jnp.where(col < k_valid, q, 0.0)                              # padded centers masked out
    q_ref[...] = q * _recip(jnp.sum(q, axis=1, keepdims=True))


def student_t_q_fused(t_list, cluster_layer, alpha=1.0):
    """t_list: list of (B, D or D_pad) arrays. Returns list of (B, K) row-normalized q."""
    n = len(t_list)
    B = t_list[0].shape[0]
    K, D_c = cluster_layer.shape
    D_pad = _round_up(max(max(t.shape[1] for t in t_list), D_c), 128)
    K_pad = _round_up(K, 128)

    c = jnp.pad(cluster_layer.astype(jnp.float32), ((0, K_pad - K), (0, D_pad - D_c)))
    c_sq = jnp.sum(c * c, axis=1)[None, :]                 # (1, K_pad) f32 (exact squared norms)
    ct = c.T.astype(jnp.bfloat16)                          # one-time (D_pad, K_pad) transpose

    t_all = jnp.concatenate(
        [jnp.pad(t.astype(jnp.float32), ((0, 0), (0, D_pad - t.shape[1]))) for t in t_list],
        axis=0)                                            # (n*B, D_pad): cluster layer loaded once
    N = n * B
    TN = min(512, _round_up(N, 8))
    N_pad = _round_up(N, TN)
    if N_pad != N:
        t_all = jnp.pad(t_all, ((0, N_pad - N), (0, 0)))

    vmem = _vmem_limit_bytes(
        [((TN, D_pad), 4), ((D_pad, K_pad), 2), ((1, K_pad), 4), ((TN, K_pad), 4)],
        cap=_scoped_vmem_cap())

    q_all = pl.pallas_call(
        functools.partial(_q_kernel, alpha=float(alpha), k_valid=int(K)),
        grid=(N_pad // TN,),
        in_specs=[pl.BlockSpec((TN, D_pad), lambda i: (i, 0)),
                  pl.BlockSpec((D_pad, K_pad), lambda i: (0, 0)),
                  pl.BlockSpec((1, K_pad), lambda i: (0, 0))],
        out_specs=pl.BlockSpec((TN, K_pad), lambda i: (i, 0)),
        out_shape=jax.ShapeDtypeStruct((N_pad, K_pad), jnp.float32),
        compiler_params=pltpu.CompilerParams(
            dimension_semantics=("parallel",),               # rows split across TCs on v7x
            vmem_limit_bytes=vmem),
    )(t_all, ct, c_sq)
    return [q_all[i * B:(i + 1) * B, :K] for i in range(n)]


# --------------------------------------------------------------------------
# Kernel 3: train-mode similarity masks + consistency entropy (scalar-only output)
# Gridded over query-row tiles; Gram matmuls in bf16; scalar accumulated in a VMEM scratch.
# --------------------------------------------------------------------------
def _sim_entropy_kernel(o0_ref, o1_ref, loss_ref, acc_ref, *, pos_mode, u, l, tb, n_elem):
    i = pl.program_id(0)
    eps = 1e-10

    @pl.when(i == 0)
    def _():
        acc_ref[...] = jnp.zeros_like(acc_ref)

    def normalize(o):
        # TODO(synk): torch F.normalize clamps ||o|| at 1e-12; rsqrt(sum+1e-24) diverges only for
        #             near-zero rows.
        return o * lax.rsqrt(jnp.sum(o * o, axis=1, keepdims=True) + 1e-24)

    start = pl.multiple_of(i * tb, tb)
    q0 = normalize(o0_ref[pl.ds(start, tb), :]).astype(jnp.bfloat16)   # (tb, D) query rows
    q1 = normalize(o1_ref[pl.ds(start, tb), :]).astype(jnp.bfloat16)
    k0 = normalize(o0_ref[...]).astype(jnp.bfloat16)                   # (B_pad, D) keys
    k1 = normalize(o1_ref[...]).astype(jnp.bfloat16)

    dn = (((1,), (1,)), ((), ()))                                      # A @ B.T
    s0 = lax.dot_general(q0, k0, dimension_numbers=dn, preferred_element_type=jnp.float32)
    s1 = lax.dot_general(q1, k1, dimension_numbers=dn, preferred_element_type=jnp.float32)

    def pos(sim):
        if pos_mode == "gt":        # task_name == 'ag_news'
            return sim > u
        elif pos_mode == "eq":      # 'chinese' in task_name
            # TODO(synk): mirrors torch `sim == u` exact float equality (numerically fragile).
            return sim == u
        else:                       # default branch
            return sim >= u

    all_pos = jnp.logical_and(pos(s0), pos(s1)).astype(jnp.float32)    # == num_views for 2 views
    all_neg = jnp.logical_and(s0 < l, s1 < l).astype(jnp.float32)

    # Halved EUP log count: one log per (pos, neg) pair instead of two.
    pos_ent = -jnp.log(jnp.clip(s0, eps, 1.0) * jnp.clip(s1, eps, 1.0))
    neg_ent = -jnp.log(jnp.clip(1.0 - s0, eps, 1.0) * jnp.clip(1.0 - s1, eps, 1.0))
    part = jnp.sum(pos_ent * all_pos + neg_ent * all_neg, axis=1, keepdims=True)
    acc_ref[...] += jnp.sum(part, axis=0, keepdims=True)               # (1, 1)

    @pl.when(i == pl.num_programs(0) - 1)
    def _():
        # TODO(synk): flat 5/B^2 weighting mirrors the (unreachable) torch entropy term; the
        #             reachable torch return is InstanceLoss*beta, which is not provided.
        loss_ref[...] = acc_ref[...] * (5.0 / n_elem)


def consistency_entropy(out0, out1, u_threshold, l_threshold, task_name="clustering"):
    B, D = out0.shape
    if task_name == "ag_news":
        pos_mode = "gt"
    elif "chinese" in task_name:
        pos_mode = "eq"
    else:
        pos_mode = "geq"

    TB = min(256, _round_up(B, 8))
    B_pad = _round_up(B, TB)
    o0 = out0.astype(jnp.float32)
    o1 = out1.astype(jnp.float32)
    if B_pad != B:
        # Zero rows normalize to zero -> zero sims -> zero contribution to both entropy terms.
        o0 = jnp.pad(o0, ((0, B_pad - B), (0, 0)))
        o1 = jnp.pad(o1, ((0, B_pad - B), (0, 0)))

    vmem = _vmem_limit_bytes([((B_pad, D), 4)] * 2 + [((TB, B_pad), 4)] * 4,
                             cap=_scoped_vmem_cap())

    loss = pl.pallas_call(
        functools.partial(_sim_entropy_kernel, pos_mode=pos_mode,
                          u=float(u_threshold), l=float(l_threshold),
                          tb=TB, n_elem=B * B),
        grid=(B_pad // TB,),
        in_specs=[pl.BlockSpec((B_pad, D), lambda i: (0, 0)),
                  pl.BlockSpec((B_pad, D), lambda i: (0, 0))],
        out_specs=pl.BlockSpec((1, 1), lambda i: (0, 0)),
        out_shape=jax.ShapeDtypeStruct((1, 1), jnp.float32),
        scratch_shapes=[pltpu.VMEM((1, 1), jnp.float32)],
        compiler_params=pltpu.CompilerParams(
            dimension_semantics=("arbitrary",),              # scalar accumulator carries over grid
            vmem_limit_bytes=vmem),
    )(o0, o1)
    return loss[0, 0]


# --------------------------------------------------------------------------
# Plain-JAX glue: BertModel stand-in + BinaryViewClustering.forward orchestration
# --------------------------------------------------------------------------
def bert_encoder_standin(input_ids, embed_table, pooler_w, pooler_b):
    # TODO(synk): stands in for BertModel (embedding lookup + [CLS]-pooler); the 12-layer
    # pretrained transformer encoder is not reproduced here.
    encoded = embed_table[input_ids]                      # (B, S, Hb)
    pooled = jnp.tanh(encoded[:, 0, :] @ pooler_w + pooler_b)
    return encoded, pooled


def binary_view_clustering_forward(params, batch_inputs, u_threshold, l_threshold,
                                   mode=None, task_name="clustering",
                                   view_weight_train=False, share_bert=True):
    num_views = 2
    assert len(batch_inputs) == num_views
    D = params["cls_w"].shape[1]

    enc_list, pooled_list = [], []
    label_ids_shared = None
    for idx in range(num_views):
        input_ids, attention_mask, token_type_ids, label_ids = batch_inputs[idx]
        # share_bert=True: both views use BertForView0's weights (reference default).
        encoded, pooled = bert_encoder_standin(input_ids, params["embed"],
                                               params["pooler_w"], params["pooler_b"])
        enc_list.append(encoded)
        pooled_list.append(pooled)
        label_ids_shared = label_ids

    encoded_views = jnp.stack(enc_list, axis=0)           # (2, B, S, Hb)
    pooled_views = jnp.stack(pooled_list, axis=0)         # (2, B, Hb)
    logits_views, _ = bert_view_heads(encoded_views, pooled_views,
                                      params["dense_w"], params["dense_b"],
                                      params["cls_w"], params["cls_b"])
    # Stay at D_pad through the whole pipeline (padded columns are exactly zero).
    binary_outs = [logits_views[0], logits_views[1]]

    if view_weight_train:
        w0, w1 = params["view0_weight"], params["view1_weight"]
        ws = w0 + w1
        logits = binary_outs[0] * w0 / ws + binary_outs[1] * w1 / ws
    else:
        logits = binary_outs[0] + binary_outs[1]

    # TODO(synk): ResFusionWithGLU (fusion_net) definition not provided -> identity on logits.

    if mode == "train":
        # TODO(synk): InstanceLoss definition not provided; return the forward's
        # consistency-entropy term computed fully inside the Pallas kernel.
        return consistency_entropy(binary_outs[0], binary_outs[1],
                                   u_threshold, l_threshold, task_name)
    elif mode == "finetune":
        qs = student_t_q_fused([logits] + binary_outs, params["cluster_layer"], alpha=1.0)
        return (logits[:, :D], qs, label_ids_shared,
                [b[:, :D] for b in binary_outs])
    else:
        return logits[:, :D], [b[:, :D] for b in binary_outs]


# --------------------------------------------------------------------------
if __name__ == "__main__":
    B, S, Hb, D, K, VOCAB = 8, 8, 32, 16, 4, 64   # batch, seq, bert-hidden, head-hidden, labels

    key = jax.random.PRNGKey(0)
    ks = jax.random.split(key, 8)
    xavier_std = float(np.sqrt(2.0 / (K + D)))
    params = {
        "embed":         0.02 * jax.random.normal(ks[0], (VOCAB, Hb), jnp.float32),
        "pooler_w":      0.02 * jax.random.normal(ks[1], (Hb, Hb), jnp.float32),
        "pooler_b":      jnp.zeros((Hb,), jnp.float32),
        "dense_w":       0.02 * jax.random.normal(ks[2], (Hb, Hb), jnp.float32),
        "dense_b":       jnp.zeros((1, Hb), jnp.float32),
        "cls_w":         0.02 * jax.random.normal(ks[3], (Hb, D), jnp.float32),
        "cls_b":         jnp.zeros((1, D), jnp.float32),
        "cluster_layer": xavier_std * jax.random.normal(ks[4], (K, D), jnp.float32),
        "view0_weight":  jnp.float32(0.5),
        "view1_weight":  jnp.float32(0.5),
    }

    def make_view(kk):
        ids = jax.random.randint(kk, (B, S), 0, VOCAB, dtype=jnp.int32)
        attn = jnp.ones((B, S), jnp.int32)
        tok = jnp.zeros((B, S), jnp.int32)
        labels = (jnp.arange(B, dtype=jnp.int32) % K)
        return (ids, attn, tok, labels)

    batch_inputs = [make_view(ks[5]), make_view(ks[6])]

    # ---- finetune path (fused BERT heads + fused Student-t q via Pallas) ----
    logits, qs, labels, binary_outs = binary_view_clustering_forward(
        params, batch_inputs, u_threshold=0.9, l_threshold=0.3, mode="finetune")
    jax.block_until_ready(logits)

    # head reference check (view 0): tanh(dense(mean(enc, seq)) + pooled) -> classifier
    enc0, pooled0 = bert_encoder_standin(batch_inputs[0][0], params["embed"],
                                         params["pooler_w"], params["pooler_b"])
    ref_p0 = jnp.tanh(jnp.mean(enc0, axis=1) @ params["dense_w"] + params["dense_b"] + pooled0)
    ref_logits0 = ref_p0 @ params["cls_w"] + params["cls_b"]
    np.testing.assert_allclose(np.asarray(binary_outs[0]), np.asarray(ref_logits0),
                               atol=1e-3, rtol=1e-2)

    # q head checks (row-stochastic + match to plain-JAX reference)
    for q in qs:
        jax.block_until_ready(q)
        np.testing.assert_allclose(np.asarray(jnp.sum(q, axis=1)), np.ones(B), atol=1e-3)
    ref_dist = jnp.sum((logits[:, None, :] - params["cluster_layer"][None, :, :]) ** 2, axis=2)
    ref_q = 1.0 / (1.0 + ref_dist / 1.0)
    ref_q = ref_q / jnp.sum(ref_q, axis=1, keepdims=True)
    np.testing.assert_allclose(np.asarray(qs[0]), np.asarray(ref_q), atol=1e-3, rtol=1e-3)

    # ---- train path (similarity / mask / consistency-entropy via Pallas, scalar-only) ----
    loss_ce = binary_view_clustering_forward(
        params, batch_inputs, u_threshold=0.9, l_threshold=0.3, mode="train")
    jax.block_until_ready(loss_ce)
    assert np.isfinite(float(loss_ce))

    print("KERNEL_OK")
</pallas_src>

<mosaic_0001>
module attributes {stable_mosaic.version = 11 : i64} {
  func.func @_bert_head_kernel(%arg0: i32, %arg1: i32, %arg2: memref<1x8x8x32xbf16, #tpu.memory_space<vmem>>, %arg3: memref<1x8x32xf32, #tpu.memory_space<vmem>>, %arg4: memref<32x32xf32, #tpu.memory_space<vmem>>, %arg5: memref<1x32xf32, #tpu.memory_space<vmem>>, %arg6: memref<32x128xf32, #tpu.memory_space<vmem>>, %arg7: memref<1x128xf32, #tpu.memory_space<vmem>>, %arg8: memref<1x8x128xf32, #tpu.memory_space<vmem>>, %arg9: memref<1x8x32xf32, #tpu.memory_space<vmem>>, %arg10: memref<8x32xf32, #tpu.memory_space<vmem>>) attributes {dimension_semantics = [#tpu.dimension_semantics<parallel>, #tpu.dimension_semantics<arbitrary>], iteration_bounds = array<i64: 2, 1>, scalar_prefetch = 0 : i64, scratch_operands = 1 : i64, tpu.core_type = #tpu.core_type<tc>, window_params = [{transform_indices = @transform_0, window_bounds = array<i64: 1, 8, 8, 32>}, {transform_indices = @transform_1, window_bounds = array<i64: 1, 8, 32>}, {pipeline_mode = #tpu.pipeline_mode<synchronous>, transform_indices = @transform_2, window_bounds = array<i64: 32, 32>}, {pipeline_mode = #tpu.pipeline_mode<synchronous>, transform_indices = @transform_3, window_bounds = array<i64: 1, 32>}, {pipeline_mode = #tpu.pipeline_mode<synchronous>, transform_indices = @transform_4, window_bounds = array<i64: 32, 128>}, {pipeline_mode = #tpu.pipeline_mode<synchronous>, transform_indices = @transform_5, window_bounds = array<i64: 1, 128>}, {transform_indices = @transform_6, window_bounds = array<i64: 1, 8, 128>}, {transform_indices = @transform_7, window_bounds = array<i64: 1, 8, 32>}]} {
    %c0_i32 = arith.constant 0 : i32
    %0 = arith.cmpi eq, %arg1, %c0_i32 : i32
    %1 = arith.extui %0 : i1 to i32
    %c0_i32_0 = arith.constant 0 : i32
    %2 = arith.cmpi ne, %1, %c0_i32_0 : i32
    scf.if %2 {
      %cst_10 = arith.constant 0.000000e+00 : f32
      %13 = vector.broadcast %cst_10 : f32 to vector<8x32xf32>
      %c0_11 = arith.constant 0 : index
      %c0_12 = arith.constant 0 : index
      %14 = vector.load %arg10[%c0_11, %c0_12] : memref<8x32xf32, #tpu.memory_space<vmem>>, vector<8x32xf32>
      tpu.vector_store %arg10[%c0_11, %c0_12], %13 {strides = array<i32>} : memref<8x32xf32, #tpu.memory_space<vmem>>, vector<8x32xf32>,
    } else {
    }
    %c0 = arith.constant 0 : index
    %c0_1 = arith.constant 0 : index
    %3 = vector.load %arg10[%c0, %c0_1] : memref<8x32xf32, #tpu.memory_space<vmem>>, vector<8x32xf32>
    %c0_2 = arith.constant 0 : index
    %c0_3 = arith.constant 0 : index
    %c0_4 = arith.constant 0 : index
    %c0_5 = arith.constant 0 : index
    %4 = vector.load %arg2[%c0_2, %c0_3, %c0_4, %c0_5] : memref<1x8x8x32xbf16, #tpu.memory_space<vmem>>, vector<1x8x8x32xbf16>
    %5 = vector.shape_cast %4 : vector<1x8x8x32xbf16> to vector<8x8x32xbf16>
    %6 = arith.extf %5 : vector<8x8x32xbf16> to vector<8x8x32xf32>
    %cst = arith.constant dense<0.000000e+00> : vector<8x32xf32>
    %7 = vector.multi_reduction <add>, %6, %cst [1] : vector<8x8x32xf32> to vector<8x32xf32>
    %8 = arith.addf %3, %7 : vector<8x32xf32>
    %c0_6 = arith.constant 0 : index
    %c0_7 = arith.constant 0 : index
    %9 = vector.load %arg10[%c0_6, %c0_7] : memref<8x32xf32, #tpu.memory_space<vmem>>, vector<8x32xf32>
    tpu.vector_store %arg10[%c0_6, %c0_7], %8 {strides = array<i32>} : memref<8x32xf32, #tpu.memory_space<vmem>>, vector<8x32xf32>,
    %c0_i32_8 = arith.constant 0 : i32
    %10 = arith.cmpi eq, %arg1, %c0_i32_8 : i32
    %11 = arith.extui %10 : i1 to i32
    %c0_i32_9 = arith.constant 0 : i32
    %12 = arith.cmpi ne, %11, %c0_i32_9 : i32
    scf.if %12 {
      %c0_10 = arith.constant 0 : index
      %c0_11 = arith.constant 0 : index
      %13 = vector.load %arg10[%c0_10, %c0_11] : memref<8x32xf32, #tpu.memory_space<vmem>>, vector<8x32xf32>
      %cst_12 = arith.constant 1.250000e-01 : f32
      %14 = vector.broadcast %cst_12 : f32 to vector<8x32xf32>
      %15 = arith.mulf %13, %14 : vector<8x32xf32>
      %c0_13 = arith.constant 0 : index
      %c0_14 = arith.constant 0 : index
      %16 = vector.load %arg4[%c0_13, %c0_14] : memref<32x32xf32, #tpu.memory_space<vmem>>, vector<32x32xf32>
      %cst_15 = arith.constant dense<0.000000e+00> : vector<8x32xf32>
      %17 = tpu.matmul %15, %16, %cst_15 {dimension_numbers = #tpu.dot_dimension_numbers<[1], [0], [0], [1], [0, 0, 1, 1], [], []>} : vector<8x32xf32>, vector<32x32xf32>, vector<8x32xf32> -> vector<8x32xf32>
      %c0_16 = arith.constant 0 : index
      %c0_17 = arith.constant 0 : index
      %18 = vector.load %arg5[%c0_16, %c0_17] : memref<1x32xf32, #tpu.memory_space<vmem>>, vector<1x32xf32>
      %19 = vector.broadcast %18 : vector<1x32xf32> to vector<8x32xf32>
      %20 = arith.addf %17, %19 : vector<8x32xf32>
      %c0_18 = arith.constant 0 : index
      %c0_19 = arith.constant 0 : index
      %c0_20 = arith.constant 0 : index
      %21 = vector.load %arg3[%c0_18, %c0_19, %c0_20] : memref<1x8x32xf32, #tpu.memory_space<vmem>>, vector<1x8x32xf32>
      %22 = vector.shape_cast %21 : vector<1x8x32xf32> to vector<8x32xf32>
      %23 = arith.addf %20, %22 : vector<8x32xf32>
      %24 = math.tanh %23 : vector<8x32xf32>
      %c0_21 = arith.constant 0 : index
      %c0_22 = arith.constant 0 : index
      %c0_23 = arith.constant 0 : index
      %25 = vector.load %arg9[%c0_21, %c0_22, %c0_23] : memref<1x8x32xf32, #tpu.memory_space<vmem>>, vector<1x8x32xf32>
      %26 = vector.shape_cast %25 : vector<1x8x32xf32> to vector<8x32xf32>
      %27 = vector.shape_cast %24 : vector<8x32xf32> to vector<1x8x32xf32>
      tpu.vector_store %arg9[%c0_21, %c0_22, %c0_23], %27 {strides = array<i32>} : memref<1x8x32xf32, #tpu.memory_space<vmem>>, vector<1x8x32xf32>,
      %c0_24 = arith.constant 0 : index
      %c0_25 = arith.constant 0 : index
      %28 = vector.load %arg6[%c0_24, %c0_25] : memref<32x128xf32, #tpu.memory_space<vmem>>, vector<32x128xf32>
      %cst_26 = arith.constant dense<0.000000e+00> : vector<8x128xf32>
      %29 = tpu.matmul %24, %28, %cst_26 {dimension_numbers = #tpu.dot_dimension_numbers<[1], [0], [0], [1], [0, 0, 1, 1], [], []>} : vector<8x32xf32>, vector<32x128xf32>, vector<8x128xf32> -> vector<8x128xf32>
      %c0_27 = arith.constant 0 : index
      %c0_28 = arith.constant 0 : index
      %30 = vector.load %arg7[%c0_27, %c0_28] : memref<1x128xf32, #tpu.memory_space<vmem>>, vector<1x128xf32>
      %31 = vector.broadcast %30 : vector<1x128xf32> to vector<8x128xf32>
      %32 = arith.addf %29, %31 : vector<8x128xf32>
      %c0_29 = arith.constant 0 : index
      %c0_30 = arith.constant 0 : index
      %c0_31 = arith.constant 0 : index
      %33 = vector.load %arg8[%c0_29, %c0_30, %c0_31] : memref<1x8x128xf32, #tpu.memory_space<vmem>>, vector<1x8x128xf32>
      %34 = vector.shape_cast %33 : vector<1x8x128xf32> to vector<8x128xf32>
      %35 = vector.shape_cast %32 : vector<8x128xf32> to vector<1x8x128xf32>
      tpu.vector_store %arg8[%c0_29, %c0_30, %c0_31], %35 {strides = array<i32>} : memref<1x8x128xf32, #tpu.memory_space<vmem>>, vector<1x8x128xf32>,
    } else {
    }
    return
  }
  func.func @transform_0(%arg0: i32, %arg1: i32) -> (i32, i32, i32, i32) {
    %c0_i32 = arith.constant 0 : i32
    %c0_i32_0 = arith.constant 0 : i32
    %c0_i32_1 = arith.constant 0 : i32
    return %arg0, %c0_i32, %arg1, %c0_i32_0 : i32, i32, i32, i32
  }
  func.func @transform_1(%arg0: i32, %arg1: i32) -> (i32, i32, i32) {
    %c0_i32 = arith.constant 0 : i32
    %c0_i32_0 = arith.constant 0 : i32
    %c0_i32_1 = arith.constant 0 : i32
    return %arg0, %c0_i32, %c0_i32_0 : i32, i32, i32
  }
  func.func @transform_2(%arg0: i32, %arg1: i32) -> (i32, i32) {
    %c0_i32 = arith.constant 0 : i32
    %c0_i32_0 = arith.constant 0 : i32
    %c0_i32_1 = arith.constant 0 : i32
    return %c0_i32, %c0_i32_0 : i32, i32
  }
  func.func @transform_3(%arg0: i32, %arg1: i32) -> (i32, i32) {
    %c0_i32 = arith.constant 0 : i32
    %c0_i32_0 = arith.constant 0 : i32
    %c0_i32_1 = arith.constant 0 : i32
    return %c0_i32, %c0_i32_0 : i32, i32
  }
  func.func @transform_4(%arg0: i32, %arg1: i32) -> (i32, i32) {
    %c0_i32 = arith.constant 0 : i32
    %c0_i32_0 = arith.constant 0 : i32
    %c0_i32_1 = arith.constant 0 : i32
    return %c0_i32, %c0_i32_0 : i32, i32
  }
  func.func @transform_5(%arg0: i32, %arg1: i32) -> (i32, i32) {
    %c0_i32 = arith.constant 0 : i32
    %c0_i32_0 = arith.constant 0 : i32
    %c0_i32_1 = arith.constant 0 : i32
    return %c0_i32, %c0_i32_0 : i32, i32
  }
  func.func @transform_6(%arg0: i32, %arg1: i32) -> (i32, i32, i32) {
    %c0_i32 = arith.constant 0 : i32
    %c0_i32_0 = arith.constant 0 : i32
    %c0_i32_1 = arith.constant 0 : i32
    return %arg0, %c0_i32, %c0_i32_0 : i32, i32, i32
  }
  func.func @transform_7(%arg0: i32, %arg1: i32) -> (i32, i32, i32) {
    %c0_i32 = arith.constant 0 : i32
    %c0_i32_0 = arith.constant 0 : i32
    %c0_i32_1 = arith.constant 0 : i32
    return %arg0, %c0_i32, %c0_i32_0 : i32, i32, i32
  }
}

</mosaic_0001>

<llo_original>
// kernel: tpu_custom_call.1
$region0: #{tpu_custom_call.1}
  #allocation0 [shape = 'u32[]', space=smem, size = 0x4, offset = 0x4, fixed_abs, tag = 'smem constant byte address 0x4 - core index']
  #allocation1 [shape = 'u32[144,128]{1,0:T(1,128)}', space=vmem, size = 0x12000, scoped, tag = 'internal scratch']
  #allocation2 [shape = 'f32[8,32]{1,0:T(8,128)}', space=vmem, size = 0x1000, scoped, tag = 'scratch operand']
  %s0 = inlined_call_operand.hbm [shape: bf16[2,8,8,32], index: 0, kind: input, shape index: {}]
  %s1 = inlined_call_operand.hbm [shape: f32[2,8,32], index: 1, kind: input, shape index: {}]
  %s2 = inlined_call_operand.hbm [shape: f32[32,32], index: 2, kind: input, shape index: {}]
  %s3 = inlined_call_operand.vmem [shape: f32[1,32], index: 3, kind: input, shape index: {}]
  %s4 = inlined_call_operand.hbm [shape: f32[32,128], index: 4, kind: input, shape index: {}]
  %s5 = inlined_call_operand.vmem [shape: f32[1,128], index: 5, kind: input, shape index: {}]
  %s6 = inlined_call_operand.hbm [shape: f32[2,8,128], index: 6, kind: output, shape index: {0}]
  %s7 = inlined_call_operand.hbm [shape: f32[2,8,32], index: 7, kind: output, shape index: {1}]
  %8 = xla_tuple %s6, %s7
  %s9 = sld [smem:[#allocation0]]
  $region89: #{tpu_custom_call.1} parent=0
    _
  %s11 = ssub.s32 1, %s9
  %s12 = scalar_select 0, %s11, %s9
  $region1: #{tpu_custom_call.1} parent=0
    #allocation3 [shape = 'u8[32768]{0}', space=vmem, size = 0x8000, scoped, tag = 'input window, operand 0']
    #allocation4 [shape = 's32[2]{0}', space=sflag, size = 0x8, scoped, tag = 'scoped memory for tpu_custom_call.1']
    #allocation5 [shape = 's32[2]{0}', space=sflag, size = 0x8, scoped, tag = 'scoped memory for tpu_custom_call.1']
    #allocation6 [shape = 'u8[8192]{0}', space=vmem, size = 0x2000, scoped, tag = 'input window, operand 1']
    #allocation7 [shape = 's32[2]{0}', space=sflag, size = 0x8, scoped, tag = 'scoped memory for tpu_custom_call.1']
    #allocation8 [shape = 'u8[16384]{0}', space=vmem, size = 0x4000, scoped, tag = 'input window, operand 2, single buffered']
    #allocation9 [shape = 'u8[16384]{0}', space=vmem, size = 0x4000, scoped, tag = 'input window, operand 4, single buffered']
    #allocation10 [shape = 's32[1]{0}', space=sflag, size = 0x4, scoped, tag = 'scoped memory for tpu_custom_call.1']
    #allocation11 [shape = 'u8[8192]{0}', space=vmem, size = 0x2000, scoped, tag = 'output window, operand 0']
    #allocation12 [shape = 'u8[8192]{0}', space=vmem, size = 0x2000, scoped, tag = 'output window, operand 1']
    #allocation13 [shape = 's32[2]{0}', space=sflag, size = 0x8, scoped, tag = 'scoped memory for tpu_custom_call.1']
    %13 = vsyncpa [#allocation4], 0
    %s14 = scalar_lea.sflag [#allocation4], 1
    %15 = vsyncpa %s14, 0
    %16 = vsyncpa [#allocation7], 0
    %s17 = scalar_lea.sflag [#allocation7], 1
    %18 = vsyncpa %s17, 0
    %19 = vsyncpa [#allocation10], 0
    %20 = vsyncpa [#allocation5], 0
    %s21 = scalar_lea.sflag [#allocation5], 1
    %22 = vsyncpa %s21, 0
    %23 = vsyncpa [#allocation13], 0
    %s24 = scalar_lea.sflag [#allocation13], 1
    %25 = vsyncpa %s24, 0
    loop: start=0, step=1, limit=4
    $region2: #{tpu_custom_call.1} parent=1 // loop_pre_header
      _
    $region3: #{tpu_custom_call.1} parent=1 // loop_header
      %s27 = sphi 0, %s31
      %p28 = scmp.ge.s32.totalorder %s27, 4
      %s34 = sphi 0, %s46
      %s35 = sphi 0, %s42
      %s36 = sphi 0, %s34
      %s37 = sphi 0, %s35
      %s38 = sphi 0, %s36
      %s39 = sphi 0, %s37
      %s51 = sphi 0, %s53
      %s54 = sphi 0, %s51
      %s55 = sphi 0, %s54
      %s71 = sphi 0, %s55
      %s77 = sphi 0, %s79
      %s80 = sphi 0, %s77
      %s81 = sphi 0, %s80
      %s97 = sphi 0, %s81
      %s101 = sphi 0, %s101
      %s103 = sphi 0, %s101
      %s104 = sphi 0, %s103
      %s118 = sphi 0, %s104
      %s122 = sphi 0, %s122
      %s124 = sphi 0, %s122
      %s125 = sphi 0, %s124
      %s139 = sphi 0, %s125
      %s143 = sphi 0, %s143
      %s145 = sphi 0, %s143
      %s146 = sphi 0, %s145
      %s160 = sphi 0, %s146
      %s164 = sphi 0, %s164
      %s166 = sphi 0, %s164
      %s167 = sphi 0, %s166
      %s181 = sphi 0, %s167
      %s187 = sphi 0, %s189
      %s190 = sphi 0, %s187
      %s191 = sphi 0, %s190
      %s207 = sphi 0, %s191
      %s213 = sphi 0, %s215
      %s216 = sphi 0, %s213
      %s217 = sphi 0, %s216
      %s233 = sphi 0, %s217
    $region4: #{tpu_custom_call.1} parent=1 // loop_header_branch
      %30 = sbr.rel (%p28) target = $region8
    $region5: #{tpu_custom_call.1} parent=1 // loop_body
      %s32 = ssub.s32 %s27, 1
      %s33 = ssub.s32 %s27, 2
      %s40 = sadd.s32 1, %s35
      %p41 = scmp.ge.s32.totalorder %s40, 1
      %s42 = scalar_select %p41, 0, %s40
      %s43 = sadd.s32 1, %s34
      %s44 = scalar_select %p41, %s43, %s34
      %p45 = scmp.ge.s32.totalorder %s44, 2
      %s46 = scalar_select %p45, 0, %s44
      %s47 = ssub.s32 %s34, %s46
      %s48 = ssub.s32 %s35, %s42
      %s49 = sor.u32 %s47, %s48
      %p50 = scmp.eq.s32.totalorder %s49, 0
      %s52 = sadd.s32 %s51, 1
      %s53 = scalar_select %p50, %s51, %s52
      %p56 = pneg %p50
      %p57 = scmp.eq.s32.totalorder %s27, 1
      %p58 = por %p56, %p57
      %p59 = scmp.ne.s32.totalorder %s51, %s54
      %p60 = scmp.eq.s32.totalorder %s27, 0
      %p61 = por %p59, %p60
      %p62 = scmp.ne.s32.totalorder %s51, %s54
      %p63 = scmp.eq.s32.totalorder %s32, 1
      %p64 = por %p62, %p63
      %p65 = scmp.ne.s32.totalorder %s54, %s55
      %p66 = scmp.eq.s32.totalorder %s32, 0
      %p67 = por %p65, %p66
      %p68 = scmp.ne.s32.totalorder %s54, %s55
      %p69 = scmp.eq.s32.totalorder %s33, 1
      %p70 = por %p68, %p69
      %p72 = scmp.ne.s32.totalorder %s55, %s71
      %p73 = scmp.eq.s32.totalorder %s33, 0
      %p74 = por %p72, %p73
      %s75 = ssub.s32 %s34, %s46
      %p76 = scmp.eq.s32.totalorder %s75, 0
      %s78 = sadd.s32 %s77, 1
      %s79 = scalar_select %p76, %s77, %s78
      %p82 = pneg %p76
      %p83 = scmp.eq.s32.totalorder %s27, 1
      %p84 = por %p82, %p83
      %p85 = scmp.ne.s32.totalorder %s77, %s80
      %p86 = scmp.eq.s32.totalorder %s27, 0
      %p87 = por %p85, %p86
      %p88 = scmp.ne.s32.totalorder %s77, %s80
      %p89 = scmp.eq.s32.totalorder %s32, 1
      %p90 = por %p88, %p89
      %p91 = scmp.ne.s32.totalorder %s80, %s81
      %p92 = scmp.eq.s32.totalorder %s32, 0
      %p93 = por %p91, %p92
      %p94 = scmp.ne.s32.totalorder %s80, %s81
      %p95 = scmp.eq.s32.totalorder %s33, 1
      %p96 = por %p94, %p95
      %p98 = scmp.ne.s32.totalorder %s81, %s97
      %p99 = scmp.eq.s32.totalorder %s33, 0
      %p100 = por %p98, %p99
      %s102 = sadd.s32 %s101, 1
      %p105 = scmp.eq.s32.totalorder %s27, 1
      %p106 = scmp.ne.s32.totalorder %s101, %s103
      %p107 = scmp.eq.s32.totalorder %s27, 0
      %p108 = por %p106, %p107
      %p109 = scmp.ne.s32.totalorder %s101, %s103
      %p110 = scmp.eq.s32.totalorder %s32, 1
      %p111 = por %p109, %p110
      %p112 = scmp.ne.s32.totalorder %s103, %s104
      %p113 = scmp.eq.s32.totalorder %s32, 0
      %p114 = por %p112, %p113
      %p115 = scmp.ne.s32.totalorder %s103, %s104
      %p116 = scmp.eq.s32.totalorder %s33, 1
      %p117 = por %p115, %p116
      %p119 = scmp.ne.s32.totalorder %s104, %s118
      %p120 = scmp.eq.s32.totalorder %s33, 0
      %p121 = por %p119, %p120
      %s123 = sadd.s32 %s122, 1
      %p126 = scmp.eq.s32.totalorder %s27, 1
      %p127 = scmp.ne.s32.totalorder %s122, %s124
      %p128 = scmp.eq.s32.totalorder %s27, 0
      %p129 = por %p127, %p128
      %p130 = scmp.ne.s32.totalorder %s122, %s124
      %p131 = scmp.eq.s32.totalorder %s32, 1
      %p132 = por %p130, %p131
      %p133 = scmp.ne.s32.totalorder %s124, %s125
      %p134 = scmp.eq.s32.totalorder %s32, 0
      %p135 = por %p133, %p134
      %p136 = scmp.ne.s32.totalorder %s124, %s125
      %p137 = scmp.eq.s32.totalorder %s33, 1
      %p138 = por %p136, %p137
      %p140 = scmp.ne.s32.totalorder %s125, %s139
      %p141 = scmp.eq.s32.totalorder %s33, 0
      %p142 = por %p140, %p141
      %s144 = sadd.s32 %s143, 1
      %p147 = scmp.eq.s32.totalorder %s27, 1
      %p148 = scmp.ne.s32.totalorder %s143, %s145
      %p149 = scmp.eq.s32.totalorder %s27, 0
      %p150 = por %p148, %p149
      %p151 = scmp.ne.s32.totalorder %s143, %s145
      %p152 = scmp.eq.s32.totalorder %s32, 1
      %p153 = por %p151, %p152
      %p154 = scmp.ne.s32.totalorder %s145, %s146
      %p155 = scmp.eq.s32.totalorder %s32, 0
      %p156 = por %p154, %p155
      %p157 = scmp.ne.s32.totalorder %s145, %s146
      %p158 = scmp.eq.s32.totalorder %s33, 1
      %p159 = por %p157, %p158
      %p161 = scmp.ne.s32.totalorder %s146, %s160
      %p162 = scmp.eq.s32.totalorder %s33, 0
      %p163 = por %p161, %p162
      %s165 = sadd.s32 %s164, 1
      %p168 = scmp.eq.s32.totalorder %s27, 1
      %p169 = scmp.ne.s32.totalorder %s164, %s166
      %p170 = scmp.eq.s32.totalorder %s27, 0
      %p171 = por %p169, %p170
      %p172 = scmp.ne.s32.totalorder %s164, %s166
      %p173 = scmp.eq.s32.totalorder %s32, 1
      %p174 = por %p172, %p173
      %p175 = scmp.ne.s32.totalorder %s166, %s167
      %p176 = scmp.eq.s32.totalorder %s32, 0
      %p177 = por %p175, %p176
      %p178 = scmp.ne.s32.totalorder %s166, %s167
      %p179 = scmp.eq.s32.totalorder %s33, 1
      %p180 = por %p178, %p179
      %p182 = scmp.ne.s32.totalorder %s167, %s181
      %p183 = scmp.eq.s32.totalorder %s33, 0
      %p184 = por %p182, %p183
      %s185 = ssub.s32 %s34, %s46
      %p186 = scmp.eq.s32.totalorder %s185, 0
      %s188 = sadd.s32 %s187, 1
      %s189 = scalar_select %p186, %s187, %s188
      %p192 = pneg %p186
      %p193 = scmp.eq.s32.totalorder %s27, 1
      %p194 = por %p192, %p193
      %p195 = scmp.ne.s32.totalorder %s187, %s190
      %p196 = scmp.eq.s32.totalorder %s27, 0
      %p197 = por %p195, %p196
      %p198 = scmp.ne.s32.totalorder %s187, %s190
      %p199 = scmp.eq.s32.totalorder %s32, 1
      %p200 = por %p198, %p199
      %p201 = scmp.ne.s32.totalorder %s190, %s191
      %p202 = scmp.eq.s32.totalorder %s32, 0
      %p203 = por %p201, %p202
      %p204 = scmp.ne.s32.totalorder %s190, %s191
      %p205 = scmp.eq.s32.totalorder %s33, 1
      %p206 = por %p204, %p205
      %p208 = scmp.ne.s32.totalorder %s191, %s207
      %p209 = scmp.eq.s32.totalorder %s33, 0
      %p210 = por %p208, %p209
      %s211 = ssub.s32 %s34, %s46
      %p212 = scmp.eq.s32.totalorder %s211, 0
      %s214 = sadd.s32 %s213, 1
      %s215 = scalar_select %p212, %s213, %s214
      %p218 = pneg %p212
      %p219 = scmp.eq.s32.totalorder %s27, 1
      %p220 = por %p218, %p219
      %p221 = scmp.ne.s32.totalorder %s213, %s216
      %p222 = scmp.eq.s32.totalorder %s27, 0
      %p223 = por %p221, %p222
      %p224 = scmp.ne.s32.totalorder %s213, %s216
      %p225 = scmp.eq.s32.totalorder %s32, 1
      %p226 = por %p224, %p225
      %p227 = scmp.ne.s32.totalorder %s216, %s217
      %p228 = scmp.eq.s32.totalorder %s32, 0
      %p229 = por %p227, %p228
      %p230 = scmp.ne.s32.totalorder %s216, %s217
      %p231 = scmp.eq.s32.totalorder %s33, 1
      %p232 = por %p230, %p231
      %p234 = scmp.ne.s32.totalorder %s217, %s233
      %p235 = scmp.eq.s32.totalorder %s33, 0
      %p236 = por %p234, %p235
      %p237 = scmp.le.s32.totalorder 1, %s27
      %p238 = scmp.lt.s32.totalorder %s27, 3
      %p239 = pnand %p237, %p238
      %p240 = pneg %p239
      // Predicated region
      $region9: #{tpu_custom_call.1} parent=5 // pred_check
        _
      $region10: #{tpu_custom_call.1} parent=5 // pred_check_branch
        %242 = sbr.rel (%p239) target = $region12
      $region11: #{tpu_custom_call.1} parent=5 // pred_region
        %s243 = ssub.s32 %s27, 1
        // Predicated region
        $region13: #{tpu_custom_call.1} parent=11 // pred_check
          %p244 = pneg %p114
        $region14: #{tpu_custom_call.1} parent=11 // pred_check_branch
          %246 = sbr.rel (%p244) target = $region16
        $region15: #{tpu_custom_call.1} parent=11 // pred_region
          %s248 = ssub.s32 512, 512
          %249 = vsyncadd [#allocation7], %s248
          %s250 = sshll.u32 [#allocation8], 4
          %s251 = int_to_ptr.vmem [resolvable:$true] %s250
          %256 = dma.hbm_to_vmem [thread:$0]  %s2, 512, %s251, [#allocation7], 128, 128, 8
        $region16: #{tpu_custom_call.1} parent=11 // pred_fallthru
          _
        // Predicated region
        $region17: #{tpu_custom_call.1} parent=11 // pred_check
          %p257 = pneg %p135
        $region18: #{tpu_custom_call.1} parent=11 // pred_check_branch
          %259 = sbr.rel (%p257) target = $region20
        $region19: #{tpu_custom_call.1} parent=11 // pred_region
          _
        $region20: #{tpu_custom_call.1} parent=11 // pred_fallthru
          _
        // Predicated region
        $region21: #{tpu_custom_call.1} parent=11 // pred_check
          %p260 = pneg %p156
        $region22: #{tpu_custom_call.1} parent=11 // pred_check_branch
          %262 = sbr.rel (%p260) target = $region24
        $region23: #{tpu_custom_call.1} parent=11 // pred_region
          %s264 = ssub.s32 512, 512
          %265 = vsyncadd [#allocation10], %s264
          %s266 = sshll.u32 [#allocation9], 4
          %s267 = int_to_ptr.vmem [resolvable:$true] %s266
          %272 = dma.hbm_to_vmem [thread:$0]  %s4, 512, %s267, [#allocation10], 128, 128, 8
        $region24: #{tpu_custom_call.1} parent=11 // pred_fallthru
          _
        // Predicated region
        $region25: #{tpu_custom_call.1} parent=11 // pred_check
          %p273 = pneg %p177
        $region26: #{tpu_custom_call.1} parent=11 // pred_check_branch
          %275 = sbr.rel (%p273) target = $region28
        $region27: #{tpu_custom_call.1} parent=11 // pred_region
          _
        $region28: #{tpu_custom_call.1} parent=11 // pred_fallthru
          _
      $region12: #{tpu_custom_call.1} parent=5 // pred_fallthru
        _
      %p276 = scmp.lt.s32.totalorder %s27, 2
      // Predicated region
      $region29: #{tpu_custom_call.1} parent=5 // pred_check
        %p277 = pneg %p276
      $region30: #{tpu_custom_call.1} parent=5 // pred_check_branch
        %279 = sbr.rel (%p277) target = $region32
      $region31: #{tpu_custom_call.1} parent=5 // pred_region
        // Predicated region
        $region33: #{tpu_custom_call.1} parent=31 // pred_check
          %p280 = pneg %p61
        $region34: #{tpu_custom_call.1} parent=31 // pred_check_branch
          %282 = sbr.rel (%p280) target = $region36
        $region35: #{tpu_custom_call.1} parent=31 // pred_region
          %s283 = sand.u32 %s51, 1
          %s284 = scalar_lea.sflag [#allocation4], %s283
          %s285 = sand.u32 %s51, 1
          %s286 = smul.addr %s285, 32
          %s287 = scalar_lea.vmem [#allocation3], %s286
          %s289 = ssub.s32 512, 512
          %290 = vsyncadd %s284, %s289
          %s291 = smul.addr %s34, 8
          %s292 = sadd.s32 %s35, %s291
          %s293 = smul.addr %s292, 64
          %s294 = scalar_lea.hbm %s0, %s293
          %s295 = sshll.u32 %s287, 4
          %s296 = int_to_ptr.vmem [resolvable:$true] %s295
          %301 = dma.hbm_to_vmem [thread:$0]  %s294, 512, %s296, %s284, 64, 64, 4
        $region36: #{tpu_custom_call.1} parent=31 // pred_fallthru
          _
        // Predicated region
        $region37: #{tpu_custom_call.1} parent=31 // pred_check
          %p302 = pneg %p87
        $region38: #{tpu_custom_call.1} parent=31 // pred_check_branch
          %304 = sbr.rel (%p302) target = $region40
        $region39: #{tpu_custom_call.1} parent=31 // pred_region
          %s305 = sand.u32 %s27, 1
          %s306 = scalar_lea.sflag [#allocation7], %s305
          %s307 = sand.u32 %s77, 1
          %s308 = smul.addr %s307, 8
          %s309 = scalar_lea.vmem [#allocation6], %s308
          %s311 = ssub.s32 128, 128
          %312 = vsyncadd %s306, %s311
          %s313 = smul.addr %s34, 128
          %s314 = scalar_lea.hbm %s1, %s313
          %s316 = sshll.u32 %s309, 4
          %s317 = int_to_ptr.vmem [resolvable:$true] %s316
          %319 = dma.hbm_to_vmem [thread:$0]  %s314, 128, %s317, %s306
        $region40: #{tpu_custom_call.1} parent=31 // pred_fallthru
          _
      $region32: #{tpu_custom_call.1} parent=5 // pred_fallthru
        _
      %p320 = scmp.le.s32.totalorder 1, %s27
      %p321 = scmp.lt.s32.totalorder %s27, 3
      %p322 = pnand %p320, %p321
      %p323 = pneg %p322
      // Predicated region
      $region41: #{tpu_custom_call.1} parent=5 // pred_check
        _
      $region42: #{tpu_custom_call.1} parent=5 // pred_check_branch
        %325 = sbr.rel (%p322) target = $region44
      $region43: #{tpu_custom_call.1} parent=5 // pred_region
        %s326 = ssub.s32 %s27, 1
        %s327 = sand.u32 %s54, 1
        %s328 = scalar_lea.sflag [#allocation4], %s327
        %s329 = sand.u32 %s54, 1
        %s330 = smul.addr %s329, 32
        %s331 = scalar_lea.vmem [#allocation3], %s330
        // Predicated region
        $region45: #{tpu_custom_call.1} parent=43 // pred_check
          %p332 = pneg %p67
        $region46: #{tpu_custom_call.1} parent=43 // pred_check_branch
          %334 = sbr.rel (%p332) target = $region48
        $region47: #{tpu_custom_call.1} parent=43 // pred_region
          %335 = dma.done %s328, 512
        $region48: #{tpu_custom_call.1} parent=43 // pred_fallthru
          _
        %s336 = sand.u32 %s32, 1
        %s337 = scalar_lea.sflag [#allocation7], %s336
        %s338 = sand.u32 %s80, 1
        %s339 = smul.addr %s338, 8
        %s340 = scalar_lea.vmem [#allocation6], %s339
        // Predicated region
        $region49: #{tpu_custom_call.1} parent=43 // pred_check
          %p341 = pneg %p93
        $region50: #{tpu_custom_call.1} parent=43 // pred_check_branch
          %343 = sbr.rel (%p341) target = $region52
        $region51: #{tpu_custom_call.1} parent=43 // pred_region
          %344 = dma.done %s337, 128
        $region52: #{tpu_custom_call.1} parent=43 // pred_fallthru
          _
        // Predicated region
        $region53: #{tpu_custom_call.1} parent=43 // pred_check
          %p345 = pneg %p114
        $region54: #{tpu_custom_call.1} parent=43 // pred_check_branch
          %347 = sbr.rel (%p345) target = $region56
        $region55: #{tpu_custom_call.1} parent=43 // pred_region
          %348 = dma.done [#allocation7], 512
        $region56: #{tpu_custom_call.1} parent=43 // pred_fallthru
          _
        // Predicated region
        $region57: #{tpu_custom_call.1} parent=43 // pred_check
          %p349 = pneg %p156
        $region58: #{tpu_custom_call.1} parent=43 // pred_check_branch
          %351 = sbr.rel (%p349) target = $region60
        $region59: #{tpu_custom_call.1} parent=43 // pred_region
          %352 = dma.done [#allocation10], 512
        $region60: #{tpu_custom_call.1} parent=43 // pred_fallthru
          _
        %s353 = sand.u32 %s54, 1
        %s354 = scalar_lea.sflag [#allocation4], %s353
        %s355 = sand.u32 %s54, 1
        %s356 = smul.addr %s355, 32
        %s357 = scalar_lea.vmem [#allocation3], %s356
        %p358 = pneg %p67
        %p359 = pneg %p64
        %s360 = sand.u32 %s32, 1
        %s361 = scalar_lea.sflag [#allocation7], %s360
        %s362 = sand.u32 %s80, 1
        %s363 = smul.addr %s362, 8
        %s364 = scalar_lea.vmem [#allocation6], %s363
        %p365 = pneg %p93
        %p366 = pneg %p90
        %p367 = pneg %p114
        %p368 = pneg %p111
        %p369 = pneg %p135
        %p370 = pneg %p132
        %p371 = pneg %p156
        %p372 = pneg %p153
        %p373 = pneg %p177
        %p374 = pneg %p174
        %p375 = pneg %p203
        %p376 = pneg %p200
        %s377 = sand.u32 %s190, 1
        %s378 = scalar_lea.sflag [#allocation5], %s377
        %s379 = sand.u32 %s190, 1
        %s380 = smul.addr %s379, 8
        %s381 = scalar_lea.vmem [#allocation11], %s380
        %p382 = pneg %p229
        %p383 = pneg %p226
        %s384 = sand.u32 %s216, 1
        %s385 = scalar_lea.sflag [#allocation13], %s384
        %s386 = sand.u32 %s216, 1
        %s387 = smul.addr %s386, 8
        %s388 = scalar_lea.vmem [#allocation12], %s387
        %p389 = scmp.eq.s32.totalorder %s37, 0
        // Predicated region
        $region61: #{tpu_custom_call.1} parent=43 // pred_check
          %p390 = pneg %p389
        $region62: #{tpu_custom_call.1} parent=43 // pred_check_branch
          %392 = sbr.rel (%p390) target = $region64
        $region63: #{tpu_custom_call.1} parent=43 // pred_region
          %vm393 = vcmask 261120
          %394 = vst.msk [vmem:[#allocation2] sm:$0xff] %vm393, 0.0
        $region64: #{tpu_custom_call.1} parent=43 // pred_fallthru
          _
        %v395 = vld [vmem:[#allocation2] sm:$0xff]
        %v396 = vld [vmem:[%s331] sm:$0xf]
        %v397 = vld [vmem:[%s331 + $0x4] sm:$0xf]
        %v398 = vld [vmem:[%s331 + $0x8] sm:$0xf]
        %v399 = vld [vmem:[%s331 + $0xc] sm:$0xf]
        %v400 = vld [vmem:[%s331 + $0x10] sm:$0xf]
        %v401 = vld [vmem:[%s331 + $0x14] sm:$0xf]
        %v402 = vld [vmem:[%s331 + $0x18] sm:$0xf]
        %v403 = vld [vmem:[%s331 + $0x1c] sm:$0xf]
        %v404 = vunpack.c.l.bf16 %v396
        %v405 = vunpack.c.l.bf16 %v397
        %v406 = vunpack.c.l.bf16 %v398
        %v407 = vunpack.c.l.bf16 %v399
        %v408 = vunpack.c.l.bf16 %v400
        %v409 = vunpack.c.l.bf16 %v401
        %v410 = vunpack.c.l.bf16 %v402
        %v411 = vunpack.c.l.bf16 %v403
        %vm412 = vcmask 261120
        %v413 = vsel %vm412, %v404, 0.0
        %v414 = vrot.slane %v413, 4
        %v415 = vadd.f32 %v413, %v414
        %v416 = vrot.slane %v415, 2
        %v417 = vadd.f32 %v415, %v416
        %v418 = vrot.slane %v417, 1
        %v419 = vadd.f32 %v417, %v418
        %v420 = vsel %vm412, %v405, 0.0
        %v421 = vrot.slane %v420, 4
        %v422 = vadd.f32 %v420, %v421
        %v423 = vrot.slane %v422, 2
        %v424 = vadd.f32 %v422, %v423
        %v425 = vrot.slane %v424, 1
        %v426 = vadd.f32 %v424, %v425
        %v427 = vsel %vm412, %v406, 0.0
        %v428 = vrot.slane %v427, 4
        %v429 = vadd.f32 %v427, %v428
        %v430 = vrot.slane %v429, 2
        %v431 = vadd.f32 %v429, %v430
        %v432 = vrot.slane %v431, 1
        %v433 = vadd.f32 %v431, %v432
        %v434 = vsel %vm412, %v407, 0.0
        %v435 = vrot.slane %v434, 4
        %v436 = vadd.f32 %v434, %v435
        %v437 = vrot.slane %v436, 2
        %v438 = vadd.f32 %v436, %v437
        %v439 = vrot.slane %v438, 1
        %v440 = vadd.f32 %v438, %v439
        %v441 = vsel %vm412, %v408, 0.0
        %v442 = vrot.slane %v441, 4
        %v443 = vadd.f32 %v441, %v442
        %v444 = vrot.slane %v443, 2
        %v445 = vadd.f32 %v443, %v444
        %v446 = vrot.slane %v445, 1
        %v447 = vadd.f32 %v445, %v446
        %v448 = vsel %vm412, %v409, 0.0
        %v449 = vrot.slane %v448, 4
        %v450 = vadd.f32 %v448, %v449
        %v451 = vrot.slane %v450, 2
        %v452 = vadd.f32 %v450, %v451
        %v453 = vrot.slane %v452, 1
        %v454 = vadd.f32 %v452, %v453
        %v455 = vsel %vm412, %v410, 0.0
        %v456 = vrot.slane %v455, 4
        %v457 = vadd.f32 %v455, %v456
        %v458 = vrot.slane %v457, 2
        %v459 = vadd.f32 %v457, %v458
        %v460 = vrot.slane %v459, 1
        %v461 = vadd.f32 %v459, %v460
        %v462 = vsel %vm412, %v411, 0.0
        %v463 = vrot.slane %v462, 4
        %v464 = vadd.f32 %v462, %v463
        %v465 = vrot.slane %v464, 2
        %v466 = vadd.f32 %v464, %v465
        %v467 = vrot.slane %v466, 1
        %v468 = vadd.f32 %v466, %v467
        %vm477 = vcmask 1041409
        %v478 = vsel %vm477, %v426, %v419
        %vm479 = vcmask 1042434
        %v480 = vsel %vm479, %v433, %v478
        %vm481 = vcmask 1043459
        %v482 = vsel %vm481, %v440, %v480
        %vm483 = vcmask 1044484
        %v484 = vsel %vm483, %v447, %v482
        %vm485 = vcmask 1045509
        %v486 = vsel %vm485, %v454, %v484
        %vm487 = vcmask 1046534
        %v488 = vsel %vm487, %v461, %v486
        %vm489 = vcmask 1047559
        %v490 = vsel %vm489, %v468, %v488
        %v492 = vadd.f32 %v395, %v490
        %493 = vst.msk [vmem:[#allocation2] sm:$0xff] %vm412, %v492
        // Predicated region
        $region65: #{tpu_custom_call.1} parent=43 // pred_check
          %p494 = pneg %p389
        $region66: #{tpu_custom_call.1} parent=43 // pred_check_branch
          %496 = sbr.rel (%p494) target = $region68
        $region67: #{tpu_custom_call.1} parent=43 // pred_region
          %v497 = vld [vmem:[#allocation2] sm:$0xff]
          %v498 = vmul.f32 %v497, 0.125
          %v499 = vld [vmem:[#allocation8] sm:$0xff]
          %v500 = vld [vmem:[#allocation8 + $0x8] sm:$0xff]
          %v501 = vld [vmem:[#allocation8 + $0x10] sm:$0xff]
          %v502 = vld [vmem:[#allocation8 + $0x18] sm:$0xff]
          %v503 = vld [vmem:[%s3] sm:$0x1]
          %v505 = vlaneseq
          %v506 = vshrl.u32 %v505, 7
          %v507 = vsub.s32 0, %v506
          %v508 = vrot.slane %v503, %v507
          %v511 = vsel %vm412, %v498, 0
          %513 = vmatprep.subr.mxu0 0.0
          %514 = vmatpush1.msra.mxu0 0.0
          %515 = vmatprep.subr.mxu0 0.0
          %516 = vmatpush1.msra.mxu0 0.0
          %517 = vmatprep.subr.mxu0 0.0
          %518 = vmatpush1.msra.mxu0 0.0
          %519 = vmatprep.subr.mxu0 0.0
          %520 = vmatpush1.msra.mxu0 0.0
          %521 = vmatprep.subr.mxu0 0.0
          %522 = vmatpush1.msra.mxu0 0.0
          %523 = vmatprep.subr.mxu0 0.0
          %524 = vmatpush1.msra.mxu0 0.0
          %525 = vmatprep.subr.mxu0 0.0
          %526 = vmatpush1.msra.mxu0 0.0
          %527 = vmatprep.subr.mxu0 0.0
          %528 = vmatpush1.msra.mxu0 0.0
          %529 = vmatprep.subr.mxu0 0.0
          %530 = vmatpush1.msra.mxu0 0.0
          %531 = vmatprep.subr.mxu0 0.0
          %532 = vmatpush1.msra.mxu0 0.0
          %533 = vmatprep.subr.mxu0 0.0
          %534 = vmatpush1.msra.mxu0 0.0
          %535 = vmatprep.subr.mxu0 0.0
          %536 = vmatpush1.msra.mxu0 0.0
          %537 = vmatprep.subr.mxu0 0.0
          %538 = vmatpush1.msra.mxu0 %v502
          %539 = vmatprep.subr.mxu0 0.0
          %540 = vmatpush1.msra.mxu0 %v501
          %541 = vmatprep.subr.mxu0 0.0
          %542 = vmatpush1.msra.mxu0 %v500
          %543 = vmatprep.subr.mxu0 0.0
          %544 = vmatpush1.msra.mxu0 %v499
          %545 = vmatprep.subr.mxu0 0.0
          %546 = vmatpush2.msra.mxu0 0.0
          %547 = vmatprep.subr.mxu0 0.0
          %548 = vmatpush2.msra.mxu0 0.0
          %549 = vmatprep.subr.mxu0 0.0
          %550 = vmatpush2.msra.mxu0 0.0
          %551 = vmatprep.subr.mxu0 0.0
          %552 = vmatpush2.msra.mxu0 0.0
          %553 = vmatprep.subr.mxu0 0.0
          %554 = vmatpush2.msra.mxu0 0.0
          %555 = vmatprep.subr.mxu0 0.0
          %556 = vmatpush2.msra.mxu0 0.0
          %557 = vmatprep.subr.mxu0 0.0
          %558 = vmatpush2.msra.mxu0 0.0
          %559 = vmatprep.subr.mxu0 0.0
          %560 = vmatpush2.msra.mxu0 0.0
          %561 = vmatprep.subr.mxu0 0.0
          %562 = vmatpush2.msra.mxu0 0.0
          %563 = vmatprep.subr.mxu0 0.0
          %564 = vmatpush2.msra.mxu0 0.0
          %565 = vmatprep.subr.mxu0 0.0
          %566 = vmatpush2.msra.mxu0 0.0
          %567 = vmatprep.subr.mxu0 0.0
          %568 = vmatpush2.msra.mxu0 0.0
          %569 = vmatprep.subr.mxu0 0.0
          %570 = vmatpush2.msra.mxu0 0.0
          %571 = vmatprep.subr.mxu0 0.0
          %572 = vmatpush2.msra.mxu0 0.0
          %573 = vmatprep.subr.mxu0 0.0
          %574 = vmatpush2.msra.mxu0 0.0
          %575 = vmatprep.subr.mxu0 0.0
          %576 = vmatpush2.msra.mxu0 0.0
          %577 = vmatprep.mubr.f32.mxu0 0.0
          %578 = vmatmul.mubr.f32.gmra.mxu0 %v511
          %v579 = vpop.f32.mrf.mxu0
          %v580 = vadd.f32 %v508, %v579
          %v581 = vpop.f32.mrf.mxu0
          %582 = vdwg.mxu0
          %v583 = vld [vmem:[%s340] sm:$0xff]
          %v584 = vadd.f32 %v580, %v583
          %v585 = vtanh.pop %v584
          %586 = vst.msk [vmem:[%s388] sm:$0xff] %vm412, %v585
          %v587 = vld [vmem:[#allocation9] sm:$0xff]
          %v588 = vld [vmem:[#allocation9 + $0x8] sm:$0xff]
          %v589 = vld [vmem:[#allocation9 + $0x10] sm:$0xff]
          %v590 = vld [vmem:[#allocation9 + $0x18] sm:$0xff]
          %v591 = vld [vmem:[%s5] sm:$0x1]
          %v593 = vlaneseq
          %v594 = vshrl.u32 %v593, 7
          %v595 = vsub.s32 0, %v594
          %v596 = vrot.slane %v591, %v595
          %v599 = vsel %vm412, %v585, 0
          %601 = vmatprep.subr.mxu0 0.0
          %602 = vmatpush1.msra.mxu0 0.0
          %603 = vmatprep.subr.mxu0 0.0
          %604 = vmatpush1.msra.mxu0 0.0
          %605 = vmatprep.subr.mxu0 0.0
          %606 = vmatpush1.msra.mxu0 0.0
          %607 = vmatprep.subr.mxu0 0.0
          %608 = vmatpush1.msra.mxu0 0.0
          %609 = vmatprep.subr.mxu0 0.0
          %610 = vmatpush1.msra.mxu0 0.0
          %611 = vmatprep.subr.mxu0 0.0
          %612 = vmatpush1.msra.mxu0 0.0
          %613 = vmatprep.subr.mxu0 0.0
          %614 = vmatpush1.msra.mxu0 0.0
          %615 = vmatprep.subr.mxu0 0.0
          %616 = vmatpush1.msra.mxu0 0.0
          %617 = vmatprep.subr.mxu0 0.0
          %618 = vmatpush1.msra.mxu0 0.0
          %619 = vmatprep.subr.mxu0 0.0
          %620 = vmatpush1.msra.mxu0 0.0
          %621 = vmatprep.subr.mxu0 0.0
          %622 = vmatpush1.msra.mxu0 0.0
          %623 = vmatprep.subr.mxu0 0.0
          %624 = vmatpush1.msra.mxu0 0.0
          %625 = vmatprep.subr.mxu0 0.0
          %626 = vmatpush1.msra.mxu0 %v590
          %627 = vmatprep.subr.mxu0 0.0
          %628 = vmatpush1.msra.mxu0 %v589
          %629 = vmatprep.subr.mxu0 0.0
          %630 = vmatpush1.msra.mxu0 %v588
          %631 = vmatprep.subr.mxu0 0.0
          %632 = vmatpush1.msra.mxu0 %v587
          %633 = vmatprep.subr.mxu0 0.0
          %634 = vmatpush2.msra.mxu0 0.0
          %635 = vmatprep.subr.mxu0 0.0
          %636 = vmatpush2.msra.mxu0 0.0
          %637 = vmatprep.subr.mxu0 0.0
          %638 = vmatpush2.msra.mxu0 0.0
          %639 = vmatprep.subr.mxu0 0.0
          %640 = vmatpush2.msra.mxu0 0.0
          %641 = vmatprep.subr.mxu0 0.0
          %642 = vmatpush2.msra.mxu0 0.0
          %643 = vmatprep.subr.mxu0 0.0
          %644 = vmatpush2.msra.mxu0 0.0
          %645 = vmatprep.subr.mxu0 0.0
          %646 = vmatpush2.msra.mxu0 0.0
          %647 = vmatprep.subr.mxu0 0.0
          %648 = vmatpush2.msra.mxu0 0.0
          %649 = vmatprep.subr.mxu0 0.0
          %650 = vmatpush2.msra.mxu0 0.0
          %651 = vmatprep.subr.mxu0 0.0
          %652 = vmatpush2.msra.mxu0 0.0
          %653 = vmatprep.subr.mxu0 0.0
          %654 = vmatpush2.msra.mxu0 0.0
          %655 = vmatprep.subr.mxu0 0.0
          %656 = vmatpush2.msra.mxu0 0.0
          %657 = vmatprep.subr.mxu0 0.0
          %658 = vmatpush2.msra.mxu0 0.0
          %659 = vmatprep.subr.mxu0 0.0
          %660 = vmatpush2.msra.mxu0 0.0
          %661 = vmatprep.subr.mxu0 0.0
          %662 = vmatpush2.msra.mxu0 0.0
          %663 = vmatprep.subr.mxu0 0.0
          %664 = vmatpush2.msra.mxu0 0.0
          %665 = vmatprep.mubr.f32.mxu0 0.0
          %666 = vmatmul.mubr.f32.gmra.mxu0 %v599
          %v667 = vpop.f32.mrf.mxu0
          %v668 = vadd.f32 %v596, %v667
          %v669 = vpop.f32.mrf.mxu0
          %670 = vdwg.mxu0
          %671 = vst [vmem:[%s381] sm:$0xff] %v668
        $region68: #{tpu_custom_call.1} parent=43 // pred_fallthru
          _
        %s672 = sand.u32 %s190, 1
        %s673 = scalar_lea.sflag [#allocation5], %s672
        %s674 = sand.u32 %s190, 1
        %s675 = smul.addr %s674, 8
        %s676 = scalar_lea.vmem [#allocation11], %s675
        %s677 = sand.u32 %s216, 1
        %s678 = scalar_lea.sflag [#allocation13], %s677
        %s679 = sand.u32 %s216, 1
        %s680 = smul.addr %s679, 8
        %s681 = scalar_lea.vmem [#allocation12], %s680
        // Predicated region
        $region69: #{tpu_custom_call.1} parent=43 // pred_check
          %p682 = pneg %p200
        $region70: #{tpu_custom_call.1} parent=43 // pred_check_branch
          %684 = sbr.rel (%p682) target = $region72
        $region71: #{tpu_custom_call.1} parent=43 // pred_region
          %s686 = ssub.s32 128, 128
          %687 = vsyncadd %s673, %s686
          %s688 = smul.addr %s36, 128
          %s689 = scalar_lea.hbm %s6, %s688
          %s691 = sshll.u32 %s676, 4
          %s692 = int_to_ptr.vmem [resolvable:$true] %s691
          %694 = dma.vmem_to_hbm [thread:$0]  %s692, 128, %s689, %s673
        $region72: #{tpu_custom_call.1} parent=43 // pred_fallthru
          _
        // Predicated region
        $region73: #{tpu_custom_call.1} parent=43 // pred_check
          %p695 = pneg %p226
        $region74: #{tpu_custom_call.1} parent=43 // pred_check_branch
          %697 = sbr.rel (%p695) target = $region76
        $region75: #{tpu_custom_call.1} parent=43 // pred_region
          %s699 = ssub.s32 128, 128
          %700 = vsyncadd %s678, %s699
          %s701 = smul.addr %s36, 128
          %s702 = scalar_lea.hbm %s7, %s701
          %s704 = sshll.u32 %s681, 4
          %s705 = int_to_ptr.vmem [resolvable:$true] %s704
          %707 = dma.vmem_to_hbm [thread:$0]  %s705, 128, %s702, %s678
        $region76: #{tpu_custom_call.1} parent=43 // pred_fallthru
          _
      $region44: #{tpu_custom_call.1} parent=5 // pred_fallthru
        _
      %p708 = scmp.le.s32.totalorder 2, %s27
      // Predicated region
      $region77: #{tpu_custom_call.1} parent=5 // pred_check
        %p709 = pneg %p708
      $region78: #{tpu_custom_call.1} parent=5 // pred_check_branch
        %711 = sbr.rel (%p709) target = $region80
      $region79: #{tpu_custom_call.1} parent=5 // pred_region
        %s712 = ssub.s32 %s27, 2
        // Predicated region
        $region81: #{tpu_custom_call.1} parent=79 // pred_check
          %p713 = pneg %p206
        $region82: #{tpu_custom_call.1} parent=79 // pred_check_branch
          %715 = sbr.rel (%p713) target = $region84
        $region83: #{tpu_custom_call.1} parent=79 // pred_region
          %s716 = sand.u32 %s191, 1
          %s717 = scalar_lea.sflag [#allocation5], %s716
          %s718 = sand.u32 %s191, 1
          %s719 = smul.addr %s718, 8
          %s720 = scalar_lea.vmem [#allocation11], %s719
          %721 = dma.done %s717, 128
        $region84: #{tpu_custom_call.1} parent=79 // pred_fallthru
          _
        // Predicated region
        $region85: #{tpu_custom_call.1} parent=79 // pred_check
          %p722 = pneg %p232
        $region86: #{tpu_custom_call.1} parent=79 // pred_check_branch
          %724 = sbr.rel (%p722) target = $region88
        $region87: #{tpu_custom_call.1} parent=79 // pred_region
          %s725 = sand.u32 %s217, 1
          %s726 = scalar_lea.sflag [#allocation13], %s725
          %s727 = sand.u32 %s217, 1
          %s728 = smul.addr %s727, 8
          %s729 = scalar_lea.vmem [#allocation12], %s728
          %730 = dma.done %s726, 128
        $region88: #{tpu_custom_call.1} parent=79 // pred_fallthru
          _
      $region80: #{tpu_custom_call.1} parent=5 // pred_fallthru
        _
    $region6: #{tpu_custom_call.1} parent=1 // loop_footer
      %s31 = sadd.s32 1, %s27
    $region7: #{tpu_custom_call.1} parent=1 // loop_footer_branch
      %26 = sbr.rel target = $region3
    $region8: #{tpu_custom_call.1} parent=1 // loop_exit
      _
    %731 = vsyncpa [#allocation4], 1
    %s732 = scalar_lea.sflag [#allocation4], 1
    %733 = vsyncpa %s732, 1
    %734 = vsyncpa [#allocation7], 1
    %s735 = scalar_lea.sflag [#allocation7], 1
    %736 = vsyncpa %s735, 1
    %737 = vsyncpa [#allocation10], 1
    %738 = vsyncpa [#allocation5], 1
    %s739 = scalar_lea.sflag [#allocation5], 1
    %740 = vsyncpa %s739, 1
    %741 = vsyncpa [#allocation13], 1
    %s742 = scalar_lea.sflag [#allocation13], 1
    %743 = vsyncpa %s742, 1

</llo_original>
